<compile_context>
chip_gen: v5e
topology: v5e:2x2
jax: 0.10.0
libtpu: 0.0.40
codegen_flags: <defaults>
</compile_context>

<pallas_src>
import functools

import jax
import jax.numpy as jnp
from jax.experimental import pallas as pl
from jax.experimental.pallas import tpu as pltpu

B = 2
T = 8
D_MODEL = 32
N_HEADS = 4
D_HEAD = D_MODEL // N_HEADS


# ------------------------------- kernel ------------------------------------
def mhsa_kernel(x_ref, w_ref, b_ref, out_ref, *, n_heads):
    t, c = x_ref.shape                       # (T, C): one batch element per grid step
    d_head = c // n_heads
    ht = n_heads * t

    x = x_ref[...].astype(jnp.bfloat16)      # (T, C)
    w = w_ref[...]                           # (C, 4C) bf16: [:, :3C]=Wqkv^T (q pre-scaled), [:, 3C:]=Wo^T
    b = b_ref[...]                           # (1, 4C) f32:  [:, :3C]=b_qkv (b_q pre-scaled), [:, 3C:]=b_o

    # Fused QKV projection (softmax scale already folded into the q columns/bias).
    qkv = jnp.dot(x, w[:, :3 * c],
                  preferred_element_type=jnp.float32) + b[:, :3 * c]        # (T, 3C) f32
    q = qkv[:, 0 * c:1 * c]                                                  # (T, C) f32 (pre-scaled)
    k = qkv[:, 1 * c:2 * c].astype(jnp.bfloat16)                             # (T, C) bf16
    v = qkv[:, 2 * c:3 * c].astype(jnp.bfloat16)                             # (T, C) bf16

    # Head-batching: stack the H heads block-diagonally along sublanes.
    # head_sel[h*T + t, c] == True iff lane column c belongs to head h.
    row = jax.lax.broadcasted_iota(jnp.int32, (ht, c), 0)
    col = jax.lax.broadcasted_iota(jnp.int32, (ht, c), 1)
    head_sel = None
    for h in range(n_heads):                 # static unroll; iota + compares only
        blk = ((row >= h * t) & (row < (h + 1) * t) &
               (col >= h * d_head) & (col < (h + 1) * d_head))
        head_sel = blk if head_sel is None else (head_sel | blk)

    # Q_bd row block h keeps only head h's lane columns of q, so ONE NT matmul
    # against the full k computes every head's q_h @ k_h^T simultaneously.
    q_rep = jnp.concatenate([q] * n_heads, axis=0)                           # (H*T, C)
    q_bd = jnp.where(head_sel, q_rep, 0.0).astype(jnp.bfloat16)
    s = jax.lax.dot_general(q_bd, k, (((1,), (1,)), ((), ())),
                            preferred_element_type=jnp.float32)              # (H*T, T) f32

    # Additive causal bias (0 / -1e30), tiled once across the head row blocks.
    rr = jax.lax.broadcasted_iota(jnp.int32, (t, t), 0)
    cc = jax.lax.broadcasted_iota(jnp.int32, (t, t), 1)
    causal_bias = jnp.where(cc <= rr, 0.0, -1e30)                            # (T, T) f32
    s = s + jnp.concatenate([causal_bias] * n_heads, axis=0)                 # (H*T, T)

    # One softmax pass for all heads (plain row softmax over the key lanes).
    m = jnp.max(s, axis=-1, keepdims=True)
    p = jnp.exp(s - m)
    l = jnp.sum(p, axis=-1, keepdims=True)
    p = p * pl.reciprocal(l, approx=True)                                    # EUP reciprocal

    # One PV matmul for all heads; zero the cross-head lane columns and fold the H
    # row blocks back into a single (T, C) slab (lane ranges are disjoint, so the
    # fold is an exact concat-along-lanes of the per-head outputs).
    o_st = jnp.dot(p.astype(jnp.bfloat16), v,
                   preferred_element_type=jnp.float32)                       # (H*T, C) f32
    o_st = jnp.where(head_sel, o_st, 0.0)
    o = o_st[0:t, :]
    for h in range(1, n_heads):
        o = o + o_st[h * t:(h + 1) * t, :]                                   # (T, C)

    # Single output projection + bias.
    out_ref[...] = jnp.dot(o.astype(jnp.bfloat16), w[:, 3 * c:],
                           preferred_element_type=jnp.float32) + b[:, 3 * c:]


# ------------------------------- wrapper ------------------------------------
def multi_head_self_attention(x, w_packed, b_packed, n_heads=N_HEADS):
    """x: (B, T, C) f32.  w_packed: (C, 4C) bf16 = [Wqkv^T (q cols pre-scaled) | Wo^T].
    b_packed: (1, 4C) f32 (b_q pre-scaled)."""
    bx, tx, cx = x.shape
    x2d = x.reshape(bx * tx, cx)             # row block b = batch element b

    kernel = functools.partial(mhsa_kernel, n_heads=n_heads)
    out2d = pl.pallas_call(
        kernel,
        out_shape=jax.ShapeDtypeStruct((bx * tx, cx), jnp.float32),
        grid=(bx,),                          # one batch per grid step
        in_specs=[
            pl.BlockSpec((tx, cx), lambda i: (i, 0)),          # per-batch activation block
            pl.BlockSpec(w_packed.shape, lambda i: (0, 0)),    # packed weights, lane-dense (32,128)
            pl.BlockSpec(b_packed.shape, lambda i: (0, 0)),    # packed biases, lane-dense (1,128)
        ],
        out_specs=pl.BlockSpec((tx, cx), lambda i: (i, 0)),
        compiler_params=pltpu.CompilerParams(dimension_semantics=("parallel",)),
    )(x2d, w_packed, b_packed)
    return out2d.reshape(bx, tx, cx)


# --------------------------- pure-JAX reference ------------------------------
def mhsa_ref(x, w_packed, b_packed, n_heads=N_HEADS):
    """Faithful MHSA forward on the packed (pre-scaled, bf16) parameters; mirrors the
    kernel's bf16 operand-quantization points so the only remaining differences are
    the approximate reciprocal and accumulation order."""
    bx, tx, cx = x.shape
    d_head = cx // n_heads
    w = w_packed.astype(jnp.float32)
    wqkv, wo = w[:, :3 * cx], w[:, 3 * cx:]
    bqkv, bo = b_packed[0, :3 * cx], b_packed[0, 3 * cx:]

    def bq(a):  # mirror kernel's bf16 casts at matmul operands
        return a.astype(jnp.bfloat16).astype(jnp.float32)

    qkv = bq(x) @ wqkv + bqkv
    q, k, v = qkv[..., :cx], qkv[..., cx:2 * cx], qkv[..., 2 * cx:]
    q = q.reshape(bx, tx, n_heads, d_head).transpose(0, 2, 1, 3)
    k = k.reshape(bx, tx, n_heads, d_head).transpose(0, 2, 1, 3)
    v = v.reshape(bx, tx, n_heads, d_head).transpose(0, 2, 1, 3)
    # NOTE: no extra `* scale` here — the softmax scale is folded into the packed Wq / b_q.
    s = jnp.einsum('bhqd,bhkd->bhqk', bq(q), bq(k))
    causal = jnp.tril(jnp.ones((tx, tx), bool))
    s = jnp.where(causal, s, -1e30)
    p = jax.nn.softmax(s, axis=-1)
    o = jnp.einsum('bhqk,bhkd->bhqd', bq(p), bq(v))
    o = o.transpose(0, 2, 1, 3).reshape(bx, tx, cx)
    return bq(o) @ wo + bo


# --------------------------------- main --------------------------------------
if __name__ == "__main__":
    key = jax.random.PRNGKey(0)
    k1, k2, k3, k4, k5 = jax.random.split(key, 5)

    # PyTorch parameter shapes: qkv_proj.weight (3C, C), out_proj.weight (C, C)
    wqkv = 0.1 * jax.random.normal(k1, (3 * D_MODEL, D_MODEL), jnp.float32)
    bqkv = 0.05 * jax.random.normal(k2, (3 * D_MODEL,), jnp.float32)
    wo = 0.1 * jax.random.normal(k3, (D_MODEL, D_MODEL), jnp.float32)
    bo = 0.05 * jax.random.normal(k4, (D_MODEL,), jnp.float32)

    # Pack: transpose linear weights to (in, out), fold the softmax scale 1/sqrt(Dh)
    # into the q columns / q bias, concat along lanes -> (C, 4C)=(32,128) bf16 and a
    # lane-dense (1, 4C)=(1,128) f32 bias vector.
    scale = D_HEAD ** -0.5
    col_scale = jnp.concatenate([jnp.full((D_MODEL,), scale, jnp.float32),
                                 jnp.ones((2 * D_MODEL,), jnp.float32)])
    w_packed = jnp.concatenate([wqkv.T * col_scale[None, :], wo.T],
                               axis=1).astype(jnp.bfloat16)                  # (32, 128)
    b_packed = jnp.concatenate([bqkv * col_scale, bo])[None, :].astype(jnp.float32)  # (1, 128)

    x = jax.random.normal(k5, (B, T, D_MODEL), jnp.float32)

    out = multi_head_self_attention(x, w_packed, b_packed)
    out = jax.block_until_ready(out)

    ref = mhsa_ref(x, w_packed, b_packed)
    assert out.shape == (B, T, D_MODEL)
    assert jnp.allclose(out, ref, atol=2e-3, rtol=2e-2), "mismatch vs reference"

    print("KERNEL_OK")
</pallas_src>

<mosaic_0001>
module attributes {stable_mosaic.version = 11 : i64} {
  func.func @mhsa_kernel(%arg0: i32, %arg1: memref<8x32xf32, #tpu.memory_space<vmem>>, %arg2: memref<32x128xbf16, #tpu.memory_space<vmem>>, %arg3: memref<1x128xf32, #tpu.memory_space<vmem>>, %arg4: memref<8x32xf32, #tpu.memory_space<vmem>>) attributes {dimension_semantics = [#tpu.dimension_semantics<parallel>], iteration_bounds = array<i64: 2>, scalar_prefetch = 0 : i64, scratch_operands = 0 : i64, tpu.core_type = #tpu.core_type<tc>, window_params = [{transform_indices = @transform_0, window_bounds = array<i64: 8, 32>}, {pipeline_mode = #tpu.pipeline_mode<synchronous>, transform_indices = @transform_1, window_bounds = array<i64: 32, 128>}, {pipeline_mode = #tpu.pipeline_mode<synchronous>, transform_indices = @transform_2, window_bounds = array<i64: 1, 128>}, {transform_indices = @transform_3, window_bounds = array<i64: 8, 32>}]} {
    %c0 = arith.constant 0 : index
    %c0_0 = arith.constant 0 : index
    %0 = vector.load %arg1[%c0, %c0_0] : memref<8x32xf32, #tpu.memory_space<vmem>>, vector<8x32xf32>
    %1 = arith.truncf %0 : vector<8x32xf32> to vector<8x32xbf16>
    %c0_1 = arith.constant 0 : index
    %c0_2 = arith.constant 0 : index
    %2 = vector.load %arg2[%c0_1, %c0_2] : memref<32x128xbf16, #tpu.memory_space<vmem>>, vector<32x128xbf16>
    %c0_3 = arith.constant 0 : index
    %c0_4 = arith.constant 0 : index
    %3 = vector.load %arg3[%c0_3, %c0_4] : memref<1x128xf32, #tpu.memory_space<vmem>>, vector<1x128xf32>
    %4 = vector.extract_strided_slice %2 {offsets = [0, 0], sizes = [32, 96], strides = [1, 1]} : vector<32x128xbf16> to vector<32x96xbf16>
    %cst = arith.constant dense<0.000000e+00> : vector<8x96xf32>
    %5 = tpu.matmul %1, %4, %cst {dimension_numbers = #tpu.dot_dimension_numbers<[1], [0], [0], [1], [0, 0, 1, 1], [], []>} : vector<8x32xbf16>, vector<32x96xbf16>, vector<8x96xf32> -> vector<8x96xf32>
    %6 = vector.extract_strided_slice %3 {offsets = [0, 0], sizes = [1, 96], strides = [1, 1]} : vector<1x128xf32> to vector<1x96xf32>
    %7 = vector.broadcast %6 : vector<1x96xf32> to vector<8x96xf32>
    %8 = arith.addf %5, %7 : vector<8x96xf32>
    %9 = vector.extract_strided_slice %8 {offsets = [0, 0], sizes = [8, 32], strides = [1, 1]} : vector<8x96xf32> to vector<8x32xf32>
    %10 = vector.extract_strided_slice %8 {offsets = [0, 32], sizes = [8, 32], strides = [1, 1]} : vector<8x96xf32> to vector<8x32xf32>
    %11 = arith.truncf %10 : vector<8x32xf32> to vector<8x32xbf16>
    %12 = vector.extract_strided_slice %8 {offsets = [0, 64], sizes = [8, 32], strides = [1, 1]} : vector<8x96xf32> to vector<8x32xf32>
    %13 = arith.truncf %12 : vector<8x32xf32> to vector<8x32xbf16>
    %14 = tpu.iota {dimensions = array<i32: 0>} : vector<32x32xi32>
    %15 = tpu.iota {dimensions = array<i32: 1>} : vector<32x32xi32>
    %c0_i32 = arith.constant 0 : i32
    %16 = vector.broadcast %c0_i32 : i32 to vector<32x32xi32>
    %17 = arith.cmpi sge, %14, %16 : vector<32x32xi32>
    %c8_i32 = arith.constant 8 : i32
    %18 = vector.broadcast %c8_i32 : i32 to vector<32x32xi32>
    %19 = arith.cmpi slt, %14, %18 : vector<32x32xi32>
    %20 = arith.andi %17, %19 : vector<32x32xi1>
    %c0_i32_5 = arith.constant 0 : i32
    %21 = vector.broadcast %c0_i32_5 : i32 to vector<32x32xi32>
    %22 = arith.cmpi sge, %15, %21 : vector<32x32xi32>
    %23 = arith.andi %20, %22 : vector<32x32xi1>
    %c8_i32_6 = arith.constant 8 : i32
    %24 = vector.broadcast %c8_i32_6 : i32 to vector<32x32xi32>
    %25 = arith.cmpi slt, %15, %24 : vector<32x32xi32>
    %26 = arith.andi %23, %25 : vector<32x32xi1>
    %c8_i32_7 = arith.constant 8 : i32
    %27 = vector.broadcast %c8_i32_7 : i32 to vector<32x32xi32>
    %28 = arith.cmpi sge, %14, %27 : vector<32x32xi32>
    %c16_i32 = arith.constant 16 : i32
    %29 = vector.broadcast %c16_i32 : i32 to vector<32x32xi32>
    %30 = arith.cmpi slt, %14, %29 : vector<32x32xi32>
    %31 = arith.andi %28, %30 : vector<32x32xi1>
    %c8_i32_8 = arith.constant 8 : i32
    %32 = vector.broadcast %c8_i32_8 : i32 to vector<32x32xi32>
    %33 = arith.cmpi sge, %15, %32 : vector<32x32xi32>
    %34 = arith.andi %31, %33 : vector<32x32xi1>
    %c16_i32_9 = arith.constant 16 : i32
    %35 = vector.broadcast %c16_i32_9 : i32 to vector<32x32xi32>
    %36 = arith.cmpi slt, %15, %35 : vector<32x32xi32>
    %37 = arith.andi %34, %36 : vector<32x32xi1>
    %38 = arith.ori %26, %37 : vector<32x32xi1>
    %c16_i32_10 = arith.constant 16 : i32
    %39 = vector.broadcast %c16_i32_10 : i32 to vector<32x32xi32>
    %40 = arith.cmpi sge, %14, %39 : vector<32x32xi32>
    %c24_i32 = arith.constant 24 : i32
    %41 = vector.broadcast %c24_i32 : i32 to vector<32x32xi32>
    %42 = arith.cmpi slt, %14, %41 : vector<32x32xi32>
    %43 = arith.andi %40, %42 : vector<32x32xi1>
    %c16_i32_11 = arith.constant 16 : i32
    %44 = vector.broadcast %c16_i32_11 : i32 to vector<32x32xi32>
    %45 = arith.cmpi sge, %15, %44 : vector<32x32xi32>
    %46 = arith.andi %43, %45 : vector<32x32xi1>
    %c24_i32_12 = arith.constant 24 : i32
    %47 = vector.broadcast %c24_i32_12 : i32 to vector<32x32xi32>
    %48 = arith.cmpi slt, %15, %47 : vector<32x32xi32>
    %49 = arith.andi %46, %48 : vector<32x32xi1>
    %50 = arith.ori %38, %49 : vector<32x32xi1>
    %c24_i32_13 = arith.constant 24 : i32
    %51 = vector.broadcast %c24_i32_13 : i32 to vector<32x32xi32>
    %52 = arith.cmpi sge, %14, %51 : vector<32x32xi32>
    %c32_i32 = arith.constant 32 : i32
    %53 = vector.broadcast %c32_i32 : i32 to vector<32x32xi32>
    %54 = arith.cmpi slt, %14, %53 : vector<32x32xi32>
    %55 = arith.andi %52, %54 : vector<32x32xi1>
    %c24_i32_14 = arith.constant 24 : i32
    %56 = vector.broadcast %c24_i32_14 : i32 to vector<32x32xi32>
    %57 = arith.cmpi sge, %15, %56 : vector<32x32xi32>
    %58 = arith.andi %55, %57 : vector<32x32xi1>
    %c32_i32_15 = arith.constant 32 : i32
    %59 = vector.broadcast %c32_i32_15 : i32 to vector<32x32xi32>
    %60 = arith.cmpi slt, %15, %59 : vector<32x32xi32>
    %61 = arith.andi %58, %60 : vector<32x32xi1>
    %62 = arith.ori %50, %61 : vector<32x32xi1>
    %63 = tpu.concatenate %9, %9, %9, %9 in 0 : vector<8x32xf32>, vector<8x32xf32>, vector<8x32xf32>, vector<8x32xf32> -> vector<32x32xf32>
    %cst_16 = arith.constant 0.000000e+00 : f32
    %64 = vector.broadcast %cst_16 : f32 to vector<32x32xf32>
    %65 = arith.select %62, %63, %64 : vector<32x32xi1>, vector<32x32xf32>
    %66 = arith.truncf %65 : vector<32x32xf32> to vector<32x32xbf16>
    %cst_17 = arith.constant dense<0.000000e+00> : vector<32x8xf32>
    %67 = tpu.matmul %66, %11, %cst_17 {dimension_numbers = #tpu.dot_dimension_numbers<[1], [1], [0], [0], [0, 0, 1, 0], [], []>} : vector<32x32xbf16>, vector<8x32xbf16>, vector<32x8xf32> -> vector<32x8xf32>
    %68 = tpu.iota {dimensions = array<i32: 0>} : vector<8x8xi32>
    %69 = tpu.iota {dimensions = array<i32: 1>} : vector<8x8xi32>
    %70 = arith.cmpi sle, %69, %68 : vector<8x8xi32>
    %cst_18 = arith.constant 0.000000e+00 : f32
    %cst_19 = arith.constant -1.000000e+30 : f32
    %71 = vector.broadcast %cst_18 : f32 to vector<8x8xf32>
    %72 = vector.broadcast %cst_19 : f32 to vector<8x8xf32>
    %73 = arith.select %70, %71, %72 : vector<8x8xi1>, vector<8x8xf32>
    %74 = tpu.concatenate %73, %73, %73, %73 in 0 : vector<8x8xf32>, vector<8x8xf32>, vector<8x8xf32>, vector<8x8xf32> -> vector<32x8xf32>
    %75 = arith.addf %67, %74 : vector<32x8xf32>
    %cst_20 = arith.constant dense<0xFF800000> : vector<32xf32>
    %76 = vector.multi_reduction <maximumf>, %75, %cst_20 [1] : vector<32x8xf32> to vector<32xf32>
    %77 = vector.shape_cast %76 : vector<32xf32> to vector<32x1xf32>
    %78 = vector.broadcast %77 : vector<32x1xf32> to vector<32x8xf32>
    %79 = arith.subf %75, %78 : vector<32x8xf32>
    %80 = math.exp %79 : vector<32x8xf32>
    %cst_21 = arith.constant dense<0.000000e+00> : vector<32xf32>
    %81 = vector.multi_reduction <add>, %80, %cst_21 [1] : vector<32x8xf32> to vector<32xf32>
    %82 = vector.shape_cast %81 : vector<32xf32> to vector<32x1xf32>
    %83 = tpu.reciprocal %82 {approx = true} : vector<32x1xf32> -> vector<32x1xf32>
    %84 = vector.broadcast %83 : vector<32x1xf32> to vector<32x8xf32>
    %85 = arith.mulf %80, %84 : vector<32x8xf32>
    %86 = arith.truncf %85 : vector<32x8xf32> to vector<32x8xbf16>
    %cst_22 = arith.constant dense<0.000000e+00> : vector<32x32xf32>
    %87 = tpu.matmul %86, %13, %cst_22 {dimension_numbers = #tpu.dot_dimension_numbers<[1], [0], [0], [1], [0, 0, 1, 1], [], []>} : vector<32x8xbf16>, vector<8x32xbf16>, vector<32x32xf32> -> vector<32x32xf32>
    %cst_23 = arith.constant 0.000000e+00 : f32
    %88 = vector.broadcast %cst_23 : f32 to vector<32x32xf32>
    %89 = arith.select %62, %87, %88 : vector<32x32xi1>, vector<32x32xf32>
    %90 = vector.extract_strided_slice %89 {offsets = [0, 0], sizes = [8, 32], strides = [1, 1]} : vector<32x32xf32> to vector<8x32xf32>
    %91 = vector.extract_strided_slice %89 {offsets = [8, 0], sizes = [8, 32], strides = [1, 1]} : vector<32x32xf32> to vector<8x32xf32>
    %92 = arith.addf %90, %91 : vector<8x32xf32>
    %93 = vector.extract_strided_slice %89 {offsets = [16, 0], sizes = [8, 32], strides = [1, 1]} : vector<32x32xf32> to vector<8x32xf32>
    %94 = arith.addf %92, %93 : vector<8x32xf32>
    %95 = vector.extract_strided_slice %89 {offsets = [24, 0], sizes = [8, 32], strides = [1, 1]} : vector<32x32xf32> to vector<8x32xf32>
    %96 = arith.addf %94, %95 : vector<8x32xf32>
    %97 = arith.truncf %96 : vector<8x32xf32> to vector<8x32xbf16>
    %98 = vector.extract_strided_slice %2 {offsets = [0, 96], sizes = [32, 32], strides = [1, 1]} : vector<32x128xbf16> to vector<32x32xbf16>
    %cst_24 = arith.constant dense<0.000000e+00> : vector<8x32xf32>
    %99 = tpu.matmul %97, %98, %cst_24 {dimension_numbers = #tpu.dot_dimension_numbers<[1], [0], [0], [1], [0, 0, 1, 1], [], []>} : vector<8x32xbf16>, vector<32x32xbf16>, vector<8x32xf32> -> vector<8x32xf32>
    %100 = vector.extract_strided_slice %3 {offsets = [0, 96], sizes = [1, 32], strides = [1, 1]} : vector<1x128xf32> to vector<1x32xf32>
    %101 = vector.broadcast %100 : vector<1x32xf32> to vector<8x32xf32>
    %102 = arith.addf %99, %101 : vector<8x32xf32>
    %c0_25 = arith.constant 0 : index
    %c0_26 = arith.constant 0 : index
    %103 = vector.load %arg4[%c0_25, %c0_26] : memref<8x32xf32, #tpu.memory_space<vmem>>, vector<8x32xf32>
    tpu.vector_store %arg4[%c0_25, %c0_26], %102 {strides = array<i32>} : memref<8x32xf32, #tpu.memory_space<vmem>>, vector<8x32xf32>,
    return
  }
  func.func @transform_0(%arg0: i32) -> (i32, i32) {
    %c0_i32 = arith.constant 0 : i32
    %c0_i32_0 = arith.constant 0 : i32
    return %arg0, %c0_i32 : i32, i32
  }
  func.func @transform_1(%arg0: i32) -> (i32, i32) {
    %c0_i32 = arith.constant 0 : i32
    %c0_i32_0 = arith.constant 0 : i32
    %c0_i32_1 = arith.constant 0 : i32
    return %c0_i32, %c0_i32_0 : i32, i32
  }
  func.func @transform_2(%arg0: i32) -> (i32, i32) {
    %c0_i32 = arith.constant 0 : i32
    %c0_i32_0 = arith.constant 0 : i32
    %c0_i32_1 = arith.constant 0 : i32
    return %c0_i32, %c0_i32_0 : i32, i32
  }
  func.func @transform_3(%arg0: i32) -> (i32, i32) {
    %c0_i32 = arith.constant 0 : i32
    %c0_i32_0 = arith.constant 0 : i32
    return %arg0, %c0_i32 : i32, i32
  }
}

</mosaic_0001>

<llo_original>
// kernel: tpu_custom_call.1
$region0: #{tpu_custom_call.1}
  #allocation0 [shape = 'u32[]', space=smem, size = 0x4, offset = 0x4, fixed_abs, tag = 'smem constant byte address 0x4 - core index']
  #allocation1 [shape = 'u32[72,128]{1,0:T(1,128)}', space=vmem, size = 0x9000, scoped, tag = 'internal scratch']
  %s0 = inlined_call_operand.hbm [shape: f32[16,32], index: 0, kind: input, shape index: {}]
  %s1 = inlined_call_operand.hbm [shape: bf16[32,128], index: 1, kind: input, shape index: {}]
  %s2 = inlined_call_operand.vmem [shape: f32[1,128], index: 2, kind: input, shape index: {}]
  %s3 = inlined_call_operand.hbm [shape: f32[16,32], index: 3, kind: output, shape index: {}]
  %s4 = sld [smem:[#allocation0]]
  $region53: #{tpu_custom_call.1} parent=0
    _
  %s6 = ssub.s32 1, %s4
  %s7 = scalar_select 0, %s6, %s4
  $region1: #{tpu_custom_call.1} parent=0
    #allocation2 [shape = 'u8[8192]{0}', space=vmem, size = 0x2000, scoped, tag = 'input window, operand 0']
    #allocation3 [shape = 's32[2]{0}', space=sflag, size = 0x8, scoped, tag = 'scoped memory for tpu_custom_call.1']
    #allocation4 [shape = 's32[2]{0}', space=sflag, size = 0x8, scoped, tag = 'scoped memory for tpu_custom_call.1']
    #allocation5 [shape = 'u8[8192]{0}', space=vmem, size = 0x2000, scoped, tag = 'input window, operand 1, single buffered']
    #allocation6 [shape = 's32[1]{0}', space=sflag, size = 0x4, scoped, tag = 'scoped memory for tpu_custom_call.1']
    #allocation7 [shape = 'u8[8192]{0}', space=vmem, size = 0x2000, scoped, tag = 'output window, operand 0']
    %8 = vsyncpa [#allocation3], 0
    %s9 = scalar_lea.sflag [#allocation3], 1
    %10 = vsyncpa %s9, 0
    %11 = vsyncpa [#allocation6], 0
    %12 = vsyncpa [#allocation4], 0
    %s13 = scalar_lea.sflag [#allocation4], 1
    %14 = vsyncpa %s13, 0
    loop: start=0, step=1, limit=4
    $region2: #{tpu_custom_call.1} parent=1 // loop_pre_header
      _
    $region3: #{tpu_custom_call.1} parent=1 // loop_header
      %s16 = sphi 0, %s20
      %p17 = scmp.ge.s32.totalorder %s16, 4
      %s26 = sphi 0, %s28
      %s29 = sphi 0, %s26
      %s30 = sphi 0, %s29
      %s46 = sphi 0, %s30
      %s50 = sphi 0, %s50
      %s52 = sphi 0, %s50
      %s53 = sphi 0, %s52
      %s67 = sphi 0, %s53
      %s71 = sphi 0, %s71
      %s73 = sphi 0, %s71
      %s74 = sphi 0, %s73
      %s88 = sphi 0, %s74
      %s94 = sphi 0, %s96
      %s97 = sphi 0, %s94
      %s98 = sphi 0, %s97
      %s114 = sphi 0, %s98
    $region4: #{tpu_custom_call.1} parent=1 // loop_header_branch
      %19 = sbr.rel (%p17) target = $region8
    $region5: #{tpu_custom_call.1} parent=1 // loop_body
      %s21 = ssub.s32 %s16, 1
      %s22 = ssub.s32 %s16, 2
      %s23 = sadd.s32 %s16, 1
      %s24 = ssub.s32 %s16, %s23
      %p25 = scmp.eq.s32.totalorder %s24, 0
      %s27 = sadd.s32 %s26, 1
      %s28 = scalar_select %p25, %s26, %s27
      %p31 = pneg %p25
      %p32 = scmp.eq.s32.totalorder %s16, 1
      %p33 = por %p31, %p32
      %p34 = scmp.ne.s32.totalorder %s26, %s29
      %p35 = scmp.eq.s32.totalorder %s16, 0
      %p36 = por %p34, %p35
      %p37 = scmp.ne.s32.totalorder %s26, %s29
      %p38 = scmp.eq.s32.totalorder %s21, 1
      %p39 = por %p37, %p38
      %p40 = scmp.ne.s32.totalorder %s29, %s30
      %p41 = scmp.eq.s32.totalorder %s21, 0
      %p42 = por %p40, %p41
      %p43 = scmp.ne.s32.totalorder %s29, %s30
      %p44 = scmp.eq.s32.totalorder %s22, 1
      %p45 = por %p43, %p44
      %p47 = scmp.ne.s32.totalorder %s30, %s46
      %p48 = scmp.eq.s32.totalorder %s22, 0
      %p49 = por %p47, %p48
      %s51 = sadd.s32 %s50, 1
      %p54 = scmp.eq.s32.totalorder %s16, 1
      %p55 = scmp.ne.s32.totalorder %s50, %s52
      %p56 = scmp.eq.s32.totalorder %s16, 0
      %p57 = por %p55, %p56
      %p58 = scmp.ne.s32.totalorder %s50, %s52
      %p59 = scmp.eq.s32.totalorder %s21, 1
      %p60 = por %p58, %p59
      %p61 = scmp.ne.s32.totalorder %s52, %s53
      %p62 = scmp.eq.s32.totalorder %s21, 0
      %p63 = por %p61, %p62
      %p64 = scmp.ne.s32.totalorder %s52, %s53
      %p65 = scmp.eq.s32.totalorder %s22, 1
      %p66 = por %p64, %p65
      %p68 = scmp.ne.s32.totalorder %s53, %s67
      %p69 = scmp.eq.s32.totalorder %s22, 0
      %p70 = por %p68, %p69
      %s72 = sadd.s32 %s71, 1
      %p75 = scmp.eq.s32.totalorder %s16, 1
      %p76 = scmp.ne.s32.totalorder %s71, %s73
      %p77 = scmp.eq.s32.totalorder %s16, 0
      %p78 = por %p76, %p77
      %p79 = scmp.ne.s32.totalorder %s71, %s73
      %p80 = scmp.eq.s32.totalorder %s21, 1
      %p81 = por %p79, %p80
      %p82 = scmp.ne.s32.totalorder %s73, %s74
      %p83 = scmp.eq.s32.totalorder %s21, 0
      %p84 = por %p82, %p83
      %p85 = scmp.ne.s32.totalorder %s73, %s74
      %p86 = scmp.eq.s32.totalorder %s22, 1
      %p87 = por %p85, %p86
      %p89 = scmp.ne.s32.totalorder %s74, %s88
      %p90 = scmp.eq.s32.totalorder %s22, 0
      %p91 = por %p89, %p90
      %s92 = ssub.s32 %s16, %s23
      %p93 = scmp.eq.s32.totalorder %s92, 0
      %s95 = sadd.s32 %s94, 1
      %s96 = scalar_select %p93, %s94, %s95
      %p99 = pneg %p93
      %p100 = scmp.eq.s32.totalorder %s16, 1
      %p101 = por %p99, %p100
      %p102 = scmp.ne.s32.totalorder %s94, %s97
      %p103 = scmp.eq.s32.totalorder %s16, 0
      %p104 = por %p102, %p103
      %p105 = scmp.ne.s32.totalorder %s94, %s97
      %p106 = scmp.eq.s32.totalorder %s21, 1
      %p107 = por %p105, %p106
      %p108 = scmp.ne.s32.totalorder %s97, %s98
      %p109 = scmp.eq.s32.totalorder %s21, 0
      %p110 = por %p108, %p109
      %p111 = scmp.ne.s32.totalorder %s97, %s98
      %p112 = scmp.eq.s32.totalorder %s22, 1
      %p113 = por %p111, %p112
      %p115 = scmp.ne.s32.totalorder %s98, %s114
      %p116 = scmp.eq.s32.totalorder %s22, 0
      %p117 = por %p115, %p116
      %p118 = scmp.le.s32.totalorder 1, %s16
      %p119 = scmp.lt.s32.totalorder %s16, 3
      %p120 = pnand %p118, %p119
      %p121 = pneg %p120
      // Predicated region
      $region9: #{tpu_custom_call.1} parent=5 // pred_check
        _
      $region10: #{tpu_custom_call.1} parent=5 // pred_check_branch
        %123 = sbr.rel (%p120) target = $region12
      $region11: #{tpu_custom_call.1} parent=5 // pred_region
        %s124 = ssub.s32 %s16, 1
        // Predicated region
        $region13: #{tpu_custom_call.1} parent=11 // pred_check
          %p125 = pneg %p63
        $region14: #{tpu_custom_call.1} parent=11 // pred_check_branch
          %127 = sbr.rel (%p125) target = $region16
        $region15: #{tpu_custom_call.1} parent=11 // pred_region
          %129 = vsyncadd [#allocation6], 0
          %s130 = sshll.u32 %s1, 4
          %s131 = int_to_ptr.hbm [resolvable:$true] %s130
          %s132 = sshll.u32 [#allocation5], 4
          %s133 = int_to_ptr.vmem [resolvable:$true] %s132
          %138 = dma.hbm_to_vmem [thread:$0]  %s131, 256, %s133, [#allocation6], 64, 64, 4
        $region16: #{tpu_custom_call.1} parent=11 // pred_fallthru
          _
        // Predicated region
        $region17: #{tpu_custom_call.1} parent=11 // pred_check
          %p139 = pneg %p84
        $region18: #{tpu_custom_call.1} parent=11 // pred_check_branch
          %141 = sbr.rel (%p139) target = $region20
        $region19: #{tpu_custom_call.1} parent=11 // pred_region
          _
        $region20: #{tpu_custom_call.1} parent=11 // pred_fallthru
          _
      $region12: #{tpu_custom_call.1} parent=5 // pred_fallthru
        _
      %p142 = scmp.lt.s32.totalorder %s16, 2
      // Predicated region
      $region21: #{tpu_custom_call.1} parent=5 // pred_check
        %p143 = pneg %p142
      $region22: #{tpu_custom_call.1} parent=5 // pred_check_branch
        %145 = sbr.rel (%p143) target = $region24
      $region23: #{tpu_custom_call.1} parent=5 // pred_region
        // Predicated region
        $region25: #{tpu_custom_call.1} parent=23 // pred_check
          %p146 = pneg %p36
        $region26: #{tpu_custom_call.1} parent=23 // pred_check_branch
          %148 = sbr.rel (%p146) target = $region28
        $region27: #{tpu_custom_call.1} parent=23 // pred_region
          %s149 = sand.u32 %s26, 1
          %s150 = scalar_lea.sflag [#allocation3], %s149
          %s151 = sand.u32 %s26, 1
          %s152 = smul.addr %s151, 8
          %s153 = scalar_lea.vmem [#allocation2], %s152
          %155 = vsyncadd %s150, 0
          %s156 = smul.addr %s16, 8
          %s157 = scalar_lea.hbm %s0, %s156
          %s159 = sshll.u32 %s157, 4
          %s160 = int_to_ptr.hbm [resolvable:$true] %s159
          %s161 = sshll.u32 %s153, 4
          %s162 = int_to_ptr.vmem [resolvable:$true] %s161
          %164 = dma.hbm_to_vmem [thread:$0]  %s160, 128, %s162, %s150
        $region28: #{tpu_custom_call.1} parent=23 // pred_fallthru
          _
      $region24: #{tpu_custom_call.1} parent=5 // pred_fallthru
        _
      %p165 = scmp.le.s32.totalorder 1, %s16
      %p166 = scmp.lt.s32.totalorder %s16, 3
      %p167 = pnand %p165, %p166
      %p168 = pneg %p167
      // Predicated region
      $region29: #{tpu_custom_call.1} parent=5 // pred_check
        _
      $region30: #{tpu_custom_call.1} parent=5 // pred_check_branch
        %170 = sbr.rel (%p167) target = $region32
      $region31: #{tpu_custom_call.1} parent=5 // pred_region
        %s171 = ssub.s32 %s16, 1
        %s172 = sand.u32 %s29, 1
        %s173 = scalar_lea.sflag [#allocation3], %s172
        %s174 = sand.u32 %s29, 1
        %s175 = smul.addr %s174, 8
        %s176 = scalar_lea.vmem [#allocation2], %s175
        // Predicated region
        $region33: #{tpu_custom_call.1} parent=31 // pred_check
          %p177 = pneg %p42
        $region34: #{tpu_custom_call.1} parent=31 // pred_check_branch
          %179 = sbr.rel (%p177) target = $region36
        $region35: #{tpu_custom_call.1} parent=31 // pred_region
          %181 = dma.done %s173, 128
        $region36: #{tpu_custom_call.1} parent=31 // pred_fallthru
          _
        // Predicated region
        $region37: #{tpu_custom_call.1} parent=31 // pred_check
          %p182 = pneg %p63
        $region38: #{tpu_custom_call.1} parent=31 // pred_check_branch
          %184 = sbr.rel (%p182) target = $region40
        $region39: #{tpu_custom_call.1} parent=31 // pred_region
          %186 = dma.done [#allocation6], 256
        $region40: #{tpu_custom_call.1} parent=31 // pred_fallthru
          _
        %s187 = sand.u32 %s29, 1
        %s188 = scalar_lea.sflag [#allocation3], %s187
        %s189 = sand.u32 %s29, 1
        %s190 = smul.addr %s189, 8
        %s191 = scalar_lea.vmem [#allocation2], %s190
        %p192 = pneg %p42
        %p193 = pneg %p39
        %p194 = pneg %p63
        %p195 = pneg %p60
        %p196 = pneg %p84
        %p197 = pneg %p81
        %p198 = pneg %p110
        %p199 = pneg %p107
        %s200 = sand.u32 %s97, 1
        %s201 = scalar_lea.sflag [#allocation4], %s200
        %s202 = sand.u32 %s97, 1
        %s203 = smul.addr %s202, 8
        %s204 = scalar_lea.vmem [#allocation7], %s203
        %v206 = vld [vmem:[%s176] sm:$0xff]
        %v207 = vpack.c.bf16 %v206, %v206
        %v208 = vld [vmem:[#allocation5] sm:$0xf]
        %v209 = vld [vmem:[#allocation5 + $0x4] sm:$0xf]
        %v210 = vld [vmem:[#allocation5 + $0x8] sm:$0xf]
        %v211 = vld [vmem:[#allocation5 + $0xc] sm:$0xf]
        %v212 = vld [vmem:[%s2] sm:$0x1]
        %v214 = vperm.slane %v212, 0
        %v220 = vunpack.c.l.b16 %v208
        %v221 = vunpack.c.l.b16 %v209
        %v222 = vunpack.c.l.b16 %v210
        %v223 = vunpack.c.l.b16 %v211
        %v224 = vpack.c.b16 %v221, %v220
        %v225 = vpack.c.b16 %v223, %v222
        %vm228 = vcmask 261120
        %v230 = vsel %vm228, %v207, 0
        %232 = vmatpush.bf16.msra.mxu0 0
        %233 = vmatpush.bf16.msra.mxu0 0
        %234 = vmatpush.bf16.msra.mxu0 0
        %235 = vmatpush.bf16.msra.mxu0 0
        %236 = vmatpush.bf16.msra.mxu0 0
        %237 = vmatpush.bf16.msra.mxu0 0
        %238 = vmatpush.bf16.msra.mxu0 %v225
        %239 = vmatpush.bf16.msra.mxu0 %v224
        %240 = vmatmul.bf16.gmra.mxu0 %v230
        %v241 = vpop.f32.mrf.mxu0
        %v242 = vadd.f32 %v214, %v241
        %v243 = vpop.f32.mrf.mxu0
        %244 = vdwg.mxu0
        %v245 = vpack.c.bf16 %v242, %v242
        %v246 = vlaneseq
        %v247 = vshrl.u32 %v246, 7
        %v248 = vadd.s32 %v247, 8
        %v249 = vadd.s32 %v247, 16
        %v250 = vadd.s32 %v247, 24
        %v251 = vlaneseq
        %v252 = vand.u32 %v251, 127
        %vm253 = vcmp.ge.s32.totalorder %v247, 0
        %vm254 = vcmp.ge.s32.totalorder %v248, 0
        %vm255 = vcmp.ge.s32.totalorder %v249, 0
        %vm256 = vcmp.ge.s32.totalorder %v250, 0
        %vm257 = vcmp.lt.s32.totalorder %v247, 8
        %vm258 = vcmp.lt.s32.totalorder %v248, 8
        %vm259 = vcmp.lt.s32.totalorder %v249, 8
        %vm260 = vcmp.lt.s32.totalorder %v250, 8
        %vm261 = vmand %vm253, %vm257
        %vm262 = vmand %vm254, %vm258
        %vm263 = vmand %vm255, %vm259
        %vm264 = vmand %vm256, %vm260
        %vm265 = vcmp.ge.s32.totalorder %v252, 0
        %vm266 = vmand %vm261, %vm265
        %vm267 = vmand %vm262, %vm265
        %vm268 = vmand %vm263, %vm265
        %vm269 = vmand %vm264, %vm265
        %vm270 = vcmp.lt.s32.totalorder %v252, 8
        %vm271 = vmand %vm266, %vm270
        %vm272 = vmand %vm267, %vm270
        %vm273 = vmand %vm268, %vm270
        %vm274 = vmand %vm269, %vm270
        %vm275 = vcmp.ge.s32.totalorder %v247, 8
        %vm276 = vcmp.ge.s32.totalorder %v248, 8
        %vm277 = vcmp.ge.s32.totalorder %v249, 8
        %vm278 = vcmp.ge.s32.totalorder %v250, 8
        %vm279 = vcmp.lt.s32.totalorder %v247, 16
        %vm280 = vcmp.lt.s32.totalorder %v248, 16
        %vm281 = vcmp.lt.s32.totalorder %v249, 16
        %vm282 = vcmp.lt.s32.totalorder %v250, 16
        %vm283 = vmand %vm275, %vm279
        %vm284 = vmand %vm276, %vm280
        %vm285 = vmand %vm277, %vm281
        %vm286 = vmand %vm278, %vm282
        %vm287 = vcmp.ge.s32.totalorder %v252, 8
        %vm288 = vmand %vm283, %vm287
        %vm289 = vmand %vm284, %vm287
        %vm290 = vmand %vm285, %vm287
        %vm291 = vmand %vm286, %vm287
        %vm292 = vcmp.lt.s32.totalorder %v252, 16
        %vm293 = vmand %vm288, %vm292
        %vm294 = vmand %vm289, %vm292
        %vm295 = vmand %vm290, %vm292
        %vm296 = vmand %vm291, %vm292
        %vm297 = vmor %vm271, %vm293
        %vm298 = vmor %vm272, %vm294
        %vm299 = vmor %vm273, %vm295
        %vm300 = vmor %vm274, %vm296
        %vm301 = vcmp.ge.s32.totalorder %v247, 16
        %vm302 = vcmp.ge.s32.totalorder %v248, 16
        %vm303 = vcmp.ge.s32.totalorder %v249, 16
        %vm304 = vcmp.ge.s32.totalorder %v250, 16
        %vm305 = vcmp.lt.s32.totalorder %v247, 24
        %vm306 = vcmp.lt.s32.totalorder %v248, 24
        %vm307 = vcmp.lt.s32.totalorder %v249, 24
        %vm308 = vcmp.lt.s32.totalorder %v250, 24
        %vm309 = vmand %vm301, %vm305
        %vm310 = vmand %vm302, %vm306
        %vm311 = vmand %vm303, %vm307
        %vm312 = vmand %vm304, %vm308
        %vm313 = vcmp.ge.s32.totalorder %v252, 16
        %vm314 = vmand %vm309, %vm313
        %vm315 = vmand %vm310, %vm313
        %vm316 = vmand %vm311, %vm313
        %vm317 = vmand %vm312, %vm313
        %vm318 = vcmp.lt.s32.totalorder %v252, 24
        %vm319 = vmand %vm314, %vm318
        %vm320 = vmand %vm315, %vm318
        %vm321 = vmand %vm316, %vm318
        %vm322 = vmand %vm317, %vm318
        %vm323 = vmor %vm297, %vm319
        %vm324 = vmor %vm298, %vm320
        %vm325 = vmor %vm299, %vm321
        %vm326 = vmor %vm300, %vm322
        %vm327 = vcmp.ge.s32.totalorder %v247, 24
        %vm328 = vcmp.ge.s32.totalorder %v248, 24
        %vm329 = vcmp.ge.s32.totalorder %v249, 24
        %vm330 = vcmp.ge.s32.totalorder %v250, 24
        %vm331 = vcmp.lt.s32.totalorder %v247, 32
        %vm332 = vcmp.lt.s32.totalorder %v248, 32
        %vm333 = vcmp.lt.s32.totalorder %v249, 32
        %vm334 = vcmp.lt.s32.totalorder %v250, 32
        %vm335 = vmand %vm327, %vm331
        %vm336 = vmand %vm328, %vm332
        %vm337 = vmand %vm329, %vm333
        %vm338 = vmand %vm330, %vm334
        %vm339 = vcmp.ge.s32.totalorder %v252, 24
        %vm340 = vmand %vm335, %vm339
        %vm341 = vmand %vm336, %vm339
        %vm342 = vmand %vm337, %vm339
        %vm343 = vmand %vm338, %vm339
        %vm344 = vcmp.lt.s32.totalorder %v252, 32
        %vm345 = vmand %vm340, %vm344
        %vm346 = vmand %vm341, %vm344
        %vm347 = vmand %vm342, %vm344
        %vm348 = vmand %vm343, %vm344
        %vm349 = vmor %vm323, %vm345
        %vm350 = vmor %vm324, %vm346
        %vm351 = vmor %vm325, %vm347
        %vm352 = vmor %vm326, %vm348
        %v353 = vsel %vm349, %v242, 0.0
        %v354 = vsel %vm350, %v242, 0.0
        %v355 = vsel %vm351, %v242, 0.0
        %v356 = vsel %vm352, %v242, 0.0
        %v357 = vpack.c.bf16 %v354, %v353
        %v358 = vpack.c.bf16 %v356, %v355
        %vm359 = vcmp.le.s32.totalorder %v252, %v247
        %v360 = vsel %vm359, 0.0, -1e+30
        %362 = vrot.lane.b32.xlu0 %v245, 96
        %v363 = vpop.permute.xlu0 %362
        %v365 = vsel %vm228, %v357, 0
        %v368 = vsel %vm228, %v358, 0
        %v371 = vsel %vm228, %v363, 0
        %373 = vmatpush.bf16.xpose.msra.mxu0 0
        %374 = vmatpush.bf16.xpose.msra.mxu0 0
        %375 = vmatpush.bf16.xpose.msra.mxu0 0
        %376 = vmatpush.bf16.xpose.msra.mxu0 0
        %377 = vmatpush.bf16.xpose.msra.mxu0 0
        %378 = vmatpush.bf16.xpose.msra.mxu0 0
        %379 = vmatpush.bf16.xpose.msra.mxu0 0
        %380 = vmatpush.bf16.xpose.msra.mxu0 %v371
        %381 = vmatmul.bf16.gmra.mxu0 %v365
        %v382 = vpop.f32.mrf.mxu0
        %v383 = vadd.f32 %v360, %v382
        %v384 = vpop.f32.mrf.mxu0
        %v385 = vadd.f32 %v360, %v384
        %386 = vmatmul.bf16.gmra.mxu0 %v368
        %v387 = vpop.f32.mrf.mxu0
        %v388 = vadd.f32 %v360, %v387
        %v389 = vpop.f32.mrf.mxu0
        %v390 = vadd.f32 %v360, %v389
        %391 = vdwg.mxu0
        %vm392 = vcmask 64512
        %v393 = vsel %vm392, %v383, -inf
        %394 = vmax.xlane.f32.xlu0 %v393
        %v395 = vpop.xlane.xlu0 %394
        %v396 = vsel %vm392, %v385, -inf
        %397 = vmax.xlane.f32.xlu0 %v396
        %v398 = vpop.xlane.xlu0 %397
        %v399 = vsel %vm392, %v388, -inf
        %400 = vmax.xlane.f32.xlu0 %v399
        %v401 = vpop.xlane.xlu0 %400
        %v402 = vsel %vm392, %v390, -inf
        %403 = vmax.xlane.f32.xlu0 %v402
        %v404 = vpop.xlane.xlu0 %403
        %v405 = vsub.f32 %v383, %v395
        %v406 = vsub.f32 %v385, %v398
        %v407 = vsub.f32 %v388, %v401
        %v408 = vsub.f32 %v390, %v404
        %v409 = vmul.f32 %v405, 1.442695
        %v410 = vpow.pop %v409
        %v411 = vmul.f32 %v406, 1.442695
        %v412 = vpow.pop %v411
        %v413 = vmul.f32 %v407, 1.442695
        %v414 = vpow.pop %v413
        %v415 = vmul.f32 %v408, 1.442695
        %v416 = vpow.pop %v415
        %v417 = vsel %vm392, %v410, 0.0
        %418 = vadd.xlane.f32.xlu0 %v417
        %v419 = vpop.xlane.xlu0 %418
        %v420 = vsel %vm392, %v412, 0.0
        %421 = vadd.xlane.f32.xlu0 %v420
        %v422 = vpop.xlane.xlu0 %421
        %v423 = vsel %vm392, %v414, 0.0
        %424 = vadd.xlane.f32.xlu0 %v423
        %v425 = vpop.xlane.xlu0 %424
        %v426 = vsel %vm392, %v416, 0.0
        %427 = vadd.xlane.f32.xlu0 %v426
        %v428 = vpop.xlane.xlu0 %427
        %v429 = vrcp.pop %v419
        %v430 = vrcp.pop %v422
        %v431 = vrcp.pop %v425
        %v432 = vrcp.pop %v428
        %v433 = vmul.f32 %v410, %v429
        %v434 = vmul.f32 %v412, %v430
        %v435 = vmul.f32 %v414, %v431
        %v436 = vmul.f32 %v416, %v432
        %v437 = vpack.c.bf16 %v434, %v433
        %v438 = vpack.c.bf16 %v436, %v435
        %439 = vrot.lane.b32.xlu0 %v245, 64
        %v440 = vpop.permute.xlu0 %439
        %v442 = vsel %vm392, %v437, 0
        %v445 = vsel %vm392, %v438, 0
        %vm447 = vcmask 1043456
        %v449 = vsel %vm447, %v440, 0
        %451 = vmatpush.bf16.msra.mxu0 0
        %452 = vmatpush.bf16.msra.mxu0 0
        %453 = vmatpush.bf16.msra.mxu0 0
        %454 = vmatpush.bf16.msra.mxu0 0
        %455 = vmatpush.bf16.msra.mxu0 0
        %456 = vmatpush.bf16.msra.mxu0 0
        %457 = vmatpush.bf16.msra.mxu0 0
        %458 = vmatpush.bf16.msra.mxu0 %v449
        %459 = vmatmul.bf16.gmra.mxu0 %v442
        %v460 = vpop.f32.mrf.mxu0
        %v461 = vadd.f32 0.0, %v460
        %v462 = vpop.f32.mrf.mxu0
        %v463 = vadd.f32 0.0, %v462
        %464 = vmatmul.bf16.gmra.mxu0 %v445
        %v465 = vpop.f32.mrf.mxu0
        %v466 = vadd.f32 0.0, %v465
        %v467 = vpop.f32.mrf.mxu0
        %v468 = vadd.f32 0.0, %v467
        %469 = vdwg.mxu0
        %v470 = vsel %vm349, %v461, 0.0
        %v471 = vsel %vm350, %v463, 0.0
        %v472 = vsel %vm351, %v466, 0.0
        %v473 = vsel %vm352, %v468, 0.0
        %v474 = vadd.f32 %v470, %v471
        %v475 = vadd.f32 %v474, %v472
        %v476 = vadd.f32 %v475, %v473
        %v477 = vpack.c.bf16 %v476, %v476
        %478 = vrot.lane.b32.xlu0 %v224, 32
        %v479 = vpop.permute.xlu0 %478
        %480 = vrot.lane.b32.xlu0 %v225, 32
        %v481 = vpop.permute.xlu0 %480
        %484 = vrot.lane.b32.xlu0 %v214, 32
        %v485 = vpop.permute.xlu0 %484
        %v488 = vsel %vm228, %v477, 0
        %490 = vmatpush.bf16.msra.mxu0 0
        %491 = vmatpush.bf16.msra.mxu0 0
        %492 = vmatpush.bf16.msra.mxu0 0
        %493 = vmatpush.bf16.msra.mxu0 0
        %494 = vmatpush.bf16.msra.mxu0 0
        %495 = vmatpush.bf16.msra.mxu0 0
        %496 = vmatpush.bf16.msra.mxu0 %v481
        %497 = vmatpush.bf16.msra.mxu0 %v479
        %498 = vmatmul.bf16.gmra.mxu0 %v488
        %v499 = vpop.f32.mrf.mxu0
        %v500 = vadd.f32 %v485, %v499
        %v501 = vpop.f32.mrf.mxu0
        %502 = vdwg.mxu0
        %503 = vst.msk [vmem:[%s204] sm:$0xff] %vm228, %v500
        %s504 = sand.u32 %s97, 1
        %s505 = scalar_lea.sflag [#allocation4], %s504
        %s506 = sand.u32 %s97, 1
        %s507 = smul.addr %s506, 8
        %s508 = scalar_lea.vmem [#allocation7], %s507
        // Predicated region
        $region41: #{tpu_custom_call.1} parent=31 // pred_check
          %p509 = pneg %p107
        $region42: #{tpu_custom_call.1} parent=31 // pred_check_branch
          %511 = sbr.rel (%p509) target = $region44
        $region43: #{tpu_custom_call.1} parent=31 // pred_region
          %513 = vsyncadd %s505, 0
          %s514 = smul.addr %s21, 8
          %s515 = scalar_lea.hbm %s3, %s514
          %s517 = sshll.u32 %s508, 4
          %s518 = int_to_ptr.vmem [resolvable:$true] %s517
          %s519 = sshll.u32 %s515, 4
          %s520 = int_to_ptr.hbm [resolvable:$true] %s519
          %522 = dma.vmem_to_hbm [thread:$0]  %s518, 128, %s520, %s505
        $region44: #{tpu_custom_call.1} parent=31 // pred_fallthru
          _
      $region32: #{tpu_custom_call.1} parent=5 // pred_fallthru
        _
      %p523 = scmp.le.s32.totalorder 2, %s16
      // Predicated region
      $region45: #{tpu_custom_call.1} parent=5 // pred_check
        %p524 = pneg %p523
      $region46: #{tpu_custom_call.1} parent=5 // pred_check_branch
        %526 = sbr.rel (%p524) target = $region48
      $region47: #{tpu_custom_call.1} parent=5 // pred_region
        %s527 = ssub.s32 %s16, 2
        // Predicated region
        $region49: #{tpu_custom_call.1} parent=47 // pred_check
          %p528 = pneg %p113
        $region50: #{tpu_custom_call.1} parent=47 // pred_check_branch
          %530 = sbr.rel (%p528) target = $region52
        $region51: #{tpu_custom_call.1} parent=47 // pred_region
          %s531 = sand.u32 %s98, 1
          %s532 = scalar_lea.sflag [#allocation4], %s531
          %s533 = sand.u32 %s98, 1
          %s534 = smul.addr %s533, 8
          %s535 = scalar_lea.vmem [#allocation7], %s534
          %537 = dma.done %s532, 128
        $region52: #{tpu_custom_call.1} parent=47 // pred_fallthru
          _
      $region48: #{tpu_custom_call.1} parent=5 // pred_fallthru
        _
    $region6: #{tpu_custom_call.1} parent=1 // loop_footer
      %s20 = sadd.s32 1, %s16
    $region7: #{tpu_custom_call.1} parent=1 // loop_footer_branch
      %15 = sbr.rel target = $region3
    $region8: #{tpu_custom_call.1} parent=1 // loop_exit
      _
    %538 = vsyncpa [#allocation3], 1
    %s539 = scalar_lea.sflag [#allocation3], 1
    %540 = vsyncpa %s539, 1
    %541 = vsyncpa [#allocation6], 1
    %542 = vsyncpa [#allocation4], 1
    %s543 = scalar_lea.sflag [#allocation4], 1
    %544 = vsyncpa %s543, 1

</llo_original>
